<compile_context>
chip_gen: v7x
topology: tpu7x:2x2x1
jax: 0.10.0
libtpu: 0.0.40
codegen_flags: <defaults>
</compile_context>

<pallas_src>
import jax
import jax.numpy as jnp
from jax.experimental import pallas as pl
from jax.experimental.pallas import tpu as pltpu


def _round_up(x, m):
    return (x + m - 1) // m * m


def _silu_f32(h):
    # SiLU in f32: exp/sigmoid lower to the EUP slot, effectively free next to
    # the MXU work in the same bundle stream.
    return h * jax.nn.sigmoid(h)


def time_embedding_kernel(x_ref, w1_ref, b1_ref, w2_ref, b2_ref, o_ref, acc_ref):
    """Multi-step reduction over the hidden dim (grid axis 1, 'arbitrary')."""
    k = pl.program_id(1)
    nk = pl.num_programs(1)

    @pl.when(k == 0)
    def _init():
        acc_ref[...] = jnp.zeros_like(acc_ref)

    # Linear1 tile: native-dtype MXU inputs, f32 accumulation.
    h = jnp.dot(x_ref[...], w1_ref[...], preferred_element_type=jnp.float32)
    h = _silu_f32(h + b1_ref[...].astype(jnp.float32))

    # Linear2 partial product over this hidden slice, accumulated in f32 VMEM.
    # Cast h back to the weight dtype so the MXU sees native (e.g. bf16) inputs.
    acc_ref[...] += jnp.dot(h.astype(w2_ref.dtype), w2_ref[...],
                            preferred_element_type=jnp.float32)

    @pl.when(k == nk - 1)
    def _finalize():
        o_ref[...] = (acc_ref[...] + b2_ref[...].astype(jnp.float32)
                      ).astype(o_ref.dtype)


def time_embedding_kernel_single(x_ref, w1_ref, b1_ref, w2_ref, b2_ref, o_ref):
    """Fast path: whole hidden dim resident -> no accumulator scratch."""
    h = jnp.dot(x_ref[...], w1_ref[...], preferred_element_type=jnp.float32)
    h = _silu_f32(h + b1_ref[...].astype(jnp.float32))
    out = jnp.dot(h.astype(w2_ref.dtype), w2_ref[...],
                  preferred_element_type=jnp.float32)
    o_ref[...] = (out + b2_ref[...].astype(jnp.float32)).astype(o_ref.dtype)


def time_embedding(x, w1, b1, w2, b2, *, tb=None, th=None):
    """Fused Linear(E,4E) -> SiLU -> Linear(4E,E).

    x: (B, E); w1: (E, H); b1: (H,) or (1, H); w2: (H, E); b2: (E,) or (1, E).
    Weights stored (in_features, out_features) so the kernel does plain x @ W + b.
    """
    B, E = x.shape
    H = w1.shape[1]
    b1 = jnp.reshape(b1, (1, H))
    b2 = jnp.reshape(b2, (1, E))
    out_dtype = x.dtype

    # ---- lane/sublane-dense padding --------------------------------------
    E_pad = _round_up(E, 128)
    H_pad = _round_up(H, 128)

    # Row tile (M): at least 8 sublanes, up to 128 rows per grid step.
    if tb is None:
        tb = min(_round_up(max(B, 1), 8), 128)
    B_pad = _round_up(max(B, 8), tb)

    # Hidden tile (reduction): keep the two double-buffered weight tiles
    # (E_pad*th + th*E_pad elements, x2 buffers) under ~16 MiB so the kernel
    # fits comfortably in v7x's 64 MiB VMEM and leaves pipeline headroom.
    w_bytes = jnp.dtype(w1.dtype).itemsize
    if th is None:
        budget = 16 * 1024 * 1024
        cap = max(128, (budget // (4 * E_pad * w_bytes)) // 128 * 128)
        th = min(H_pad, cap)
        while H_pad % th:      # H_pad is a multiple of 128, so this terminates
            th -= 128
    H_pad = _round_up(H_pad, th)

    xp = jnp.zeros((B_pad, E_pad), x.dtype).at[:B, :E].set(x)
    w1p = jnp.zeros((E_pad, H_pad), w1.dtype).at[:E, :H].set(w1)
    b1p = jnp.zeros((1, H_pad), b1.dtype).at[:, :H].set(b1)
    w2p = jnp.zeros((H_pad, E_pad), w2.dtype).at[:H, :E].set(w2)
    b2p = jnp.zeros((1, E_pad), b2.dtype).at[:, :E].set(b2)

    nk = H_pad // th
    grid = (B_pad // tb, nk)   # (parallel rows, arbitrary reduction)

    in_specs = [
        pl.BlockSpec((tb, E_pad), lambda i, k: (i, 0)),   # x row tile (resident over k)
        pl.BlockSpec((E_pad, th), lambda i, k: (0, k)),   # w1 hidden slice
        pl.BlockSpec((1, th),     lambda i, k: (0, k)),   # b1 hidden slice
        pl.BlockSpec((th, E_pad), lambda i, k: (k, 0)),   # w2 hidden slice
        pl.BlockSpec((1, E_pad),  lambda i, k: (0, 0)),   # b2 (resident)
    ]
    out_spec = pl.BlockSpec((tb, E_pad), lambda i, k: (i, 0))

    if nk == 1:
        kernel = time_embedding_kernel_single
        scratch_shapes = []
    else:
        kernel = time_embedding_kernel
        scratch_shapes = [pltpu.VMEM((tb, E_pad), jnp.float32)]  # f32 accumulator

    out = pl.pallas_call(
        kernel,
        out_shape=jax.ShapeDtypeStruct((B_pad, E_pad), out_dtype),
        grid_spec=pltpu.PrefetchScalarGridSpec(
            num_scalar_prefetch=0,
            grid=grid,
            in_specs=in_specs,
            out_specs=out_spec,
            scratch_shapes=scratch_shapes,
        ),
        compiler_params=pltpu.CompilerParams(
            dimension_semantics=("parallel", "arbitrary"),
            vmem_limit_bytes=48 * 1024 * 1024,
        ),
    )(xp, w1p, b1p, w2p, b2p)

    return out[:B, :E]


def reference(x, w1, b1, w2, b2):
    h = x @ w1 + jnp.reshape(b1, (1, -1))
    h = h * jax.nn.sigmoid(h)
    return h @ w2 + jnp.reshape(b2, (1, -1))


if __name__ == "__main__":
    B = 2          # batch of timesteps
    E = 32         # embed_size
    H = 4 * E

    key = jax.random.PRNGKey(0)
    kx, k1, kb1, k2, kb2 = jax.random.split(key, 5)

    # PyTorch Linear weights are (out, in); stored here transposed as (in, out).
    x = jax.random.normal(kx, (B, E), dtype=jnp.float32)
    w1 = jax.random.normal(k1, (E, H), dtype=jnp.float32) * (1.0 / jnp.sqrt(E))
    b1 = jax.random.normal(kb1, (H,), dtype=jnp.float32) * 0.01
    w2 = jax.random.normal(k2, (H, E), dtype=jnp.float32) * (1.0 / jnp.sqrt(H))
    b2 = jax.random.normal(kb2, (E,), dtype=jnp.float32) * 0.01

    # f32 path (strict tolerance) -- exercises the single-step fast path.
    out = time_embedding(x, w1, b1, w2, b2)
    jax.block_until_ready(out)
    ref = reference(x, w1, b1, w2, b2)
    assert out.shape == (B, E)
    assert jnp.allclose(out, ref, atol=1e-4, rtol=1e-4), "f32 mismatch vs reference"

    # Force the multi-step reduction path (th=64... must be multiple of 128, so
    # pad H to 256 implicitly via th=128 with H_pad=128 -> use explicit th on a
    # larger synthetic shape instead).
    E2, H2 = 256, 1024
    x2 = jax.random.normal(kx, (B, E2), dtype=jnp.float32)
    w1_2 = jax.random.normal(k1, (E2, H2), dtype=jnp.float32) * (1.0 / jnp.sqrt(E2))
    b1_2 = jax.random.normal(kb1, (H2,), dtype=jnp.float32) * 0.01
    w2_2 = jax.random.normal(k2, (H2, E2), dtype=jnp.float32) * (1.0 / jnp.sqrt(H2))
    b2_2 = jax.random.normal(kb2, (E2,), dtype=jnp.float32) * 0.01
    out2 = time_embedding(x2, w1_2, b1_2, w2_2, b2_2, th=256)   # 4 reduction steps
    jax.block_until_ready(out2)
    ref2 = reference(x2, w1_2, b1_2, w2_2, b2_2)
    assert jnp.allclose(out2, ref2, atol=1e-3, rtol=1e-3), "multi-step mismatch"

    # bf16 path: native MXU inputs, f32 accumulation inside the kernel.
    cast = lambda a: a.astype(jnp.bfloat16)
    out_bf = time_embedding(cast(x), cast(w1), cast(b1), cast(w2), cast(b2))
    jax.block_until_ready(out_bf)
    ref_bf = reference(*(cast(a).astype(jnp.float32) for a in (x, w1, b1, w2, b2)))
    assert out_bf.dtype == jnp.bfloat16
    assert jnp.allclose(out_bf.astype(jnp.float32), ref_bf, atol=1e-1, rtol=5e-2), \
        "bf16 mismatch vs reference"

    print("KERNEL_OK")
</pallas_src>

<mosaic_0001>
module attributes {stable_mosaic.version = 11 : i64} {
  func.func @time_embedding_kernel_single(%arg0: i32, %arg1: i32, %arg2: memref<8x128xf32, #tpu.memory_space<vmem>>, %arg3: memref<128x128xf32, #tpu.memory_space<vmem>>, %arg4: memref<1x128xf32, #tpu.memory_space<vmem>>, %arg5: memref<128x128xf32, #tpu.memory_space<vmem>>, %arg6: memref<1x128xf32, #tpu.memory_space<vmem>>, %arg7: memref<8x128xf32, #tpu.memory_space<vmem>>) attributes {dimension_semantics = [#tpu.dimension_semantics<parallel>, #tpu.dimension_semantics<arbitrary>], iteration_bounds = array<i64: 1, 1>, scalar_prefetch = 0 : i64, scratch_operands = 0 : i64, tpu.core_type = #tpu.core_type<tc>, window_params = [{transform_indices = @transform_0, window_bounds = array<i64: 8, 128>}, {transform_indices = @transform_1, window_bounds = array<i64: 128, 128>}, {transform_indices = @transform_2, window_bounds = array<i64: 1, 128>}, {transform_indices = @transform_3, window_bounds = array<i64: 128, 128>}, {pipeline_mode = #tpu.pipeline_mode<synchronous>, transform_indices = @transform_4, window_bounds = array<i64: 1, 128>}, {transform_indices = @transform_5, window_bounds = array<i64: 8, 128>}]} {
    %c0 = arith.constant 0 : index
    %c0_0 = arith.constant 0 : index
    %0 = vector.load %arg2[%c0, %c0_0] : memref<8x128xf32, #tpu.memory_space<vmem>>, vector<8x128xf32>
    %c0_1 = arith.constant 0 : index
    %c0_2 = arith.constant 0 : index
    %1 = vector.load %arg3[%c0_1, %c0_2] : memref<128x128xf32, #tpu.memory_space<vmem>>, vector<128x128xf32>
    %cst = arith.constant dense<0.000000e+00> : vector<8x128xf32>
    %2 = tpu.matmul %0, %1, %cst {dimension_numbers = #tpu.dot_dimension_numbers<[1], [0], [0], [1], [0, 0, 1, 1], [], []>} : vector<8x128xf32>, vector<128x128xf32>, vector<8x128xf32> -> vector<8x128xf32>
    %c0_3 = arith.constant 0 : index
    %c0_4 = arith.constant 0 : index
    %3 = vector.load %arg4[%c0_3, %c0_4] : memref<1x128xf32, #tpu.memory_space<vmem>>, vector<1x128xf32>
    %4 = vector.broadcast %3 : vector<1x128xf32> to vector<8x128xf32>
    %5 = arith.addf %2, %4 : vector<8x128xf32>
    %6 = arith.negf %5 : vector<8x128xf32>
    %7 = math.exp %6 : vector<8x128xf32>
    %cst_5 = arith.constant 1.000000e+00 : f32
    %8 = vector.broadcast %cst_5 : f32 to vector<8x128xf32>
    %9 = arith.addf %8, %7 : vector<8x128xf32>
    %10 = arith.divf %8, %9 : vector<8x128xf32>
    %11 = arith.mulf %5, %10 : vector<8x128xf32>
    %c0_6 = arith.constant 0 : index
    %c0_7 = arith.constant 0 : index
    %12 = vector.load %arg5[%c0_6, %c0_7] : memref<128x128xf32, #tpu.memory_space<vmem>>, vector<128x128xf32>
    %cst_8 = arith.constant dense<0.000000e+00> : vector<8x128xf32>
    %13 = tpu.matmul %11, %12, %cst_8 {dimension_numbers = #tpu.dot_dimension_numbers<[1], [0], [0], [1], [0, 0, 1, 1], [], []>} : vector<8x128xf32>, vector<128x128xf32>, vector<8x128xf32> -> vector<8x128xf32>
    %c0_9 = arith.constant 0 : index
    %c0_10 = arith.constant 0 : index
    %14 = vector.load %arg6[%c0_9, %c0_10] : memref<1x128xf32, #tpu.memory_space<vmem>>, vector<1x128xf32>
    %15 = vector.broadcast %14 : vector<1x128xf32> to vector<8x128xf32>
    %16 = arith.addf %13, %15 : vector<8x128xf32>
    %c0_11 = arith.constant 0 : index
    %c0_12 = arith.constant 0 : index
    %17 = vector.load %arg7[%c0_11, %c0_12] : memref<8x128xf32, #tpu.memory_space<vmem>>, vector<8x128xf32>
    tpu.vector_store %arg7[%c0_11, %c0_12], %16 {strides = array<i32>} : memref<8x128xf32, #tpu.memory_space<vmem>>, vector<8x128xf32>,
    return
  }
  func.func @transform_0(%arg0: i32, %arg1: i32) -> (i32, i32) {
    %c0_i32 = arith.constant 0 : i32
    %c0_i32_0 = arith.constant 0 : i32
    return %arg0, %c0_i32 : i32, i32
  }
  func.func @transform_1(%arg0: i32, %arg1: i32) -> (i32, i32) {
    %c0_i32 = arith.constant 0 : i32
    %c0_i32_0 = arith.constant 0 : i32
    return %c0_i32, %arg1 : i32, i32
  }
  func.func @transform_2(%arg0: i32, %arg1: i32) -> (i32, i32) {
    %c0_i32 = arith.constant 0 : i32
    %c0_i32_0 = arith.constant 0 : i32
    return %c0_i32, %arg1 : i32, i32
  }
  func.func @transform_3(%arg0: i32, %arg1: i32) -> (i32, i32) {
    %c0_i32 = arith.constant 0 : i32
    %c0_i32_0 = arith.constant 0 : i32
    return %arg1, %c0_i32 : i32, i32
  }
  func.func @transform_4(%arg0: i32, %arg1: i32) -> (i32, i32) {
    %c0_i32 = arith.constant 0 : i32
    %c0_i32_0 = arith.constant 0 : i32
    %c0_i32_1 = arith.constant 0 : i32
    return %c0_i32, %c0_i32_0 : i32, i32
  }
  func.func @transform_5(%arg0: i32, %arg1: i32) -> (i32, i32) {
    %c0_i32 = arith.constant 0 : i32
    %c0_i32_0 = arith.constant 0 : i32
    return %arg0, %c0_i32 : i32, i32
  }
}

</mosaic_0001>

<llo_original>
// kernel: tpu_custom_call.1
$region0: #{tpu_custom_call.1}
  #allocation0 [shape = 'u32[]', space=smem, size = 0x4, offset = 0x4, fixed_abs, tag = 'smem constant byte address 0x4 - core index']
  #allocation1 [shape = 'u32[144,128]{1,0:T(1,128)}', space=vmem, size = 0x12000, scoped, tag = 'internal scratch']
  %s0 = inlined_call_operand.hbm [shape: f32[8,128], index: 0, kind: input, shape index: {}]
  %s1 = inlined_call_operand.hbm [shape: f32[128,128], index: 1, kind: input, shape index: {}]
  %s2 = inlined_call_operand.vmem [shape: f32[1,128], index: 2, kind: input, shape index: {}]
  %s3 = inlined_call_operand.hbm [shape: f32[128,128], index: 3, kind: input, shape index: {}]
  %s4 = inlined_call_operand.vmem [shape: f32[1,128], index: 4, kind: input, shape index: {}]
  %s5 = inlined_call_operand.hbm [shape: f32[8,128], index: 5, kind: output, shape index: {}]
  %s6 = sld [smem:[#allocation0]]
  $region42: #{tpu_custom_call.1} parent=0
    _
  %s8 = ssub.s32 1, %s6
  %s9 = scalar_select 0, %s8, %s6
  $region1: #{tpu_custom_call.1} parent=0
    #allocation2 [shape = 'u8[4096]{0}', space=vmem, size = 0x1000, scoped, tag = 'input window, operand 0, single buffered']
    #allocation3 [shape = 's32[1]{0}', space=sflag, size = 0x4, scoped, tag = 'scoped memory for tpu_custom_call.1']
    #allocation4 [shape = 's32[1]{0}', space=sflag, size = 0x4, scoped, tag = 'scoped memory for tpu_custom_call.1']
    #allocation5 [shape = 'u8[65536]{0}', space=vmem, size = 0x10000, scoped, tag = 'input window, operand 1, single buffered']
    #allocation6 [shape = 's32[1]{0}', space=sflag, size = 0x4, scoped, tag = 'scoped memory for tpu_custom_call.1']
    #allocation7 [shape = 'u8[65536]{0}', space=vmem, size = 0x10000, scoped, tag = 'input window, operand 3, single buffered']
    #allocation8 [shape = 'u8[4096]{0}', space=vmem, size = 0x1000, scoped, tag = 'output window, operand 0, single buffered']
    %10 = vsyncpa [#allocation3], 0
    %11 = vsyncpa [#allocation6], 0
    %12 = vsyncpa [#allocation4], 0
    // Predicated region
    $region2: #{tpu_custom_call.1} parent=1 // pred_check
      _
    $region3: #{tpu_custom_call.1} parent=1 // pred_check_branch
      %14 = sbr.rel (0) target = $region5
    $region4: #{tpu_custom_call.1} parent=1 // pred_region
      %s16 = ssub.s32 128, 128
      %17 = vsyncadd [#allocation3], %s16
      %s19 = sshll.u32 [#allocation2], 4
      %s20 = int_to_ptr.vmem [resolvable:$true] %s19
      %22 = dma.hbm_to_vmem [thread:$0]  %s0, 128, %s20, [#allocation3]
    $region5: #{tpu_custom_call.1} parent=1 // pred_fallthru
      _
    // Predicated region
    $region6: #{tpu_custom_call.1} parent=1 // pred_check
      _
    $region7: #{tpu_custom_call.1} parent=1 // pred_check_branch
      %24 = sbr.rel (0) target = $region9
    $region8: #{tpu_custom_call.1} parent=1 // pred_region
      %s26 = ssub.s32 2048, 2048
      %27 = vsyncadd [#allocation6], %s26
      %s28 = sshll.u32 [#allocation5], 4
      %s29 = int_to_ptr.vmem [resolvable:$true] %s28
      %34 = dma.hbm_to_vmem [thread:$0]  %s1, 2048, %s29, [#allocation6], 128, 128, 8
    $region9: #{tpu_custom_call.1} parent=1 // pred_fallthru
      _
    // Predicated region
    $region10: #{tpu_custom_call.1} parent=1 // pred_check
      _
    $region11: #{tpu_custom_call.1} parent=1 // pred_check_branch
      %36 = sbr.rel (0) target = $region13
    $region12: #{tpu_custom_call.1} parent=1 // pred_region
      _
    $region13: #{tpu_custom_call.1} parent=1 // pred_fallthru
      _
    // Predicated region
    $region14: #{tpu_custom_call.1} parent=1 // pred_check
      _
    $region15: #{tpu_custom_call.1} parent=1 // pred_check_branch
      %38 = sbr.rel (0) target = $region17
    $region16: #{tpu_custom_call.1} parent=1 // pred_region
      %s40 = ssub.s32 2048, 2048
      %41 = vsyncadd [#allocation6], %s40
      %s42 = sshll.u32 [#allocation7], 4
      %s43 = int_to_ptr.vmem [resolvable:$true] %s42
      %48 = dma.hbm_to_vmem [thread:$0]  %s3, 2048, %s43, [#allocation6], 128, 128, 8
    $region17: #{tpu_custom_call.1} parent=1 // pred_fallthru
      _
    // Predicated region
    $region18: #{tpu_custom_call.1} parent=1 // pred_check
      _
    $region19: #{tpu_custom_call.1} parent=1 // pred_check_branch
      %50 = sbr.rel (0) target = $region21
    $region20: #{tpu_custom_call.1} parent=1 // pred_region
      _
    $region21: #{tpu_custom_call.1} parent=1 // pred_fallthru
      _
    // Predicated region
    $region22: #{tpu_custom_call.1} parent=1 // pred_check
      _
    $region23: #{tpu_custom_call.1} parent=1 // pred_check_branch
      %52 = sbr.rel (0) target = $region25
    $region24: #{tpu_custom_call.1} parent=1 // pred_region
      %53 = dma.done [#allocation3], 128
    $region25: #{tpu_custom_call.1} parent=1 // pred_fallthru
      _
    // Predicated region
    $region26: #{tpu_custom_call.1} parent=1 // pred_check
      _
    $region27: #{tpu_custom_call.1} parent=1 // pred_check_branch
      %55 = sbr.rel (0) target = $region29
    $region28: #{tpu_custom_call.1} parent=1 // pred_region
      %56 = dma.done [#allocation6], 2048
    $region29: #{tpu_custom_call.1} parent=1 // pred_fallthru
      _
    // Predicated region
    $region30: #{tpu_custom_call.1} parent=1 // pred_check
      _
    $region31: #{tpu_custom_call.1} parent=1 // pred_check_branch
      %58 = sbr.rel (0) target = $region33
    $region32: #{tpu_custom_call.1} parent=1 // pred_region
      %59 = dma.done [#allocation6], 2048
    $region33: #{tpu_custom_call.1} parent=1 // pred_fallthru
      _
    %v60 = vld [vmem:[#allocation2] sm:$0xff]
    %v61 = vld [vmem:[#allocation5] sm:$0xff]
    %v62 = vld [vmem:[#allocation5 + $0x8] sm:$0xff]
    %v63 = vld [vmem:[#allocation5 + $0x10] sm:$0xff]
    %v64 = vld [vmem:[#allocation5 + $0x18] sm:$0xff]
    %v65 = vld [vmem:[#allocation5 + $0x20] sm:$0xff]
    %v66 = vld [vmem:[#allocation5 + $0x28] sm:$0xff]
    %v67 = vld [vmem:[#allocation5 + $0x30] sm:$0xff]
    %v68 = vld [vmem:[#allocation5 + $0x38] sm:$0xff]
    %v69 = vld [vmem:[#allocation5 + $0x40] sm:$0xff]
    %v70 = vld [vmem:[#allocation5 + $0x48] sm:$0xff]
    %v71 = vld [vmem:[#allocation5 + $0x50] sm:$0xff]
    %v72 = vld [vmem:[#allocation5 + $0x58] sm:$0xff]
    %v73 = vld [vmem:[#allocation5 + $0x60] sm:$0xff]
    %v74 = vld [vmem:[#allocation5 + $0x68] sm:$0xff]
    %v75 = vld [vmem:[#allocation5 + $0x70] sm:$0xff]
    %v76 = vld [vmem:[#allocation5 + $0x78] sm:$0xff]
    %v77 = vld [vmem:[%s2] sm:$0x1]
    %v79 = vlaneseq
    %v80 = vshrl.u32 %v79, 7
    %v81 = vsub.s32 0, %v80
    %v82 = vrot.slane %v77, %v81
    %84 = vmatprep.subr.mxu0 0.0
    %85 = vmatpush1.msra.mxu0 %v61
    %86 = vmatprep.subr.mxu0 0.0
    %87 = vmatpush1.msra.mxu0 %v62
    %88 = vmatprep.subr.mxu0 0.0
    %89 = vmatpush1.msra.mxu0 %v63
    %90 = vmatprep.subr.mxu0 0.0
    %91 = vmatpush1.msra.mxu0 %v64
    %92 = vmatprep.subr.mxu0 0.0
    %93 = vmatpush1.msra.mxu0 %v65
    %94 = vmatprep.subr.mxu0 0.0
    %95 = vmatpush1.msra.mxu0 %v66
    %96 = vmatprep.subr.mxu0 0.0
    %97 = vmatpush1.msra.mxu0 %v67
    %98 = vmatprep.subr.mxu0 0.0
    %99 = vmatpush1.msra.mxu0 %v68
    %100 = vmatprep.subr.mxu0 0.0
    %101 = vmatpush1.msra.mxu0 %v69
    %102 = vmatprep.subr.mxu0 0.0
    %103 = vmatpush1.msra.mxu0 %v70
    %104 = vmatprep.subr.mxu0 0.0
    %105 = vmatpush1.msra.mxu0 %v71
    %106 = vmatprep.subr.mxu0 0.0
    %107 = vmatpush1.msra.mxu0 %v72
    %108 = vmatprep.subr.mxu0 0.0
    %109 = vmatpush1.msra.mxu0 %v73
    %110 = vmatprep.subr.mxu0 0.0
    %111 = vmatpush1.msra.mxu0 %v74
    %112 = vmatprep.subr.mxu0 0.0
    %113 = vmatpush1.msra.mxu0 %v75
    %114 = vmatprep.subr.mxu0 0.0
    %115 = vmatpush1.msra.mxu0 %v76
    %116 = vmatprep.subr.mxu0 0.0
    %117 = vmatpush1.msra.mxu0 0.0
    %118 = vmatprep.subr.mxu0 0.0
    %119 = vmatpush1.msra.mxu0 0.0
    %120 = vmatprep.subr.mxu0 0.0
    %121 = vmatpush1.msra.mxu0 0.0
    %122 = vmatprep.subr.mxu0 0.0
    %123 = vmatpush1.msra.mxu0 0.0
    %124 = vmatprep.subr.mxu0 0.0
    %125 = vmatpush1.msra.mxu0 0.0
    %126 = vmatprep.subr.mxu0 0.0
    %127 = vmatpush1.msra.mxu0 0.0
    %128 = vmatprep.subr.mxu0 0.0
    %129 = vmatpush1.msra.mxu0 0.0
    %130 = vmatprep.subr.mxu0 0.0
    %131 = vmatpush1.msra.mxu0 0.0
    %132 = vmatprep.subr.mxu0 0.0
    %133 = vmatpush1.msra.mxu0 0.0
    %134 = vmatprep.subr.mxu0 0.0
    %135 = vmatpush1.msra.mxu0 0.0
    %136 = vmatprep.subr.mxu0 0.0
    %137 = vmatpush1.msra.mxu0 0.0
    %138 = vmatprep.subr.mxu0 0.0
    %139 = vmatpush1.msra.mxu0 0.0
    %140 = vmatprep.subr.mxu0 0.0
    %141 = vmatpush1.msra.mxu0 0.0
    %142 = vmatprep.subr.mxu0 0.0
    %143 = vmatpush1.msra.mxu0 0.0
    %144 = vmatprep.subr.mxu0 0.0
    %145 = vmatpush1.msra.mxu0 0.0
    %146 = vmatprep.subr.mxu0 0.0
    %147 = vmatpush1.msra.mxu0 0.0
    %148 = vmatprep.mubr.f32.mxu0 0.0
    %149 = vmatmul.mubr.f32.gmra.mrb[0].mxu0 %v60
    %v150 = vpop.f32.mrb[0].mxu0
    %v151 = vadd.f32 %v82, %v150
    %v152 = vpop.f32.mrb[0].mxu0
    %153 = vdwg.mxu0
    %v154 = vxor.u32 %v151, 2147483648
    %v155 = vmul.f32 %v154, 1.442695
    %v156 = vpow.pop %v155
    %v157 = vadd.f32 %v156, 1.0
    %v158 = vrcp.pop %v157
    %v159 = vmul.f32 1.0, %v158
    %v160 = vmul.f32 %v151, %v159
    %v161 = vld [vmem:[#allocation7] sm:$0xff]
    %v162 = vld [vmem:[#allocation7 + $0x8] sm:$0xff]
    %v163 = vld [vmem:[#allocation7 + $0x10] sm:$0xff]
    %v164 = vld [vmem:[#allocation7 + $0x18] sm:$0xff]
    %v165 = vld [vmem:[#allocation7 + $0x20] sm:$0xff]
    %v166 = vld [vmem:[#allocation7 + $0x28] sm:$0xff]
    %v167 = vld [vmem:[#allocation7 + $0x30] sm:$0xff]
    %v168 = vld [vmem:[#allocation7 + $0x38] sm:$0xff]
    %v169 = vld [vmem:[#allocation7 + $0x40] sm:$0xff]
    %v170 = vld [vmem:[#allocation7 + $0x48] sm:$0xff]
    %v171 = vld [vmem:[#allocation7 + $0x50] sm:$0xff]
    %v172 = vld [vmem:[#allocation7 + $0x58] sm:$0xff]
    %v173 = vld [vmem:[#allocation7 + $0x60] sm:$0xff]
    %v174 = vld [vmem:[#allocation7 + $0x68] sm:$0xff]
    %v175 = vld [vmem:[#allocation7 + $0x70] sm:$0xff]
    %v176 = vld [vmem:[#allocation7 + $0x78] sm:$0xff]
    %v177 = vld [vmem:[%s4] sm:$0x1]
    %v179 = vlaneseq
    %v180 = vshrl.u32 %v179, 7
    %v181 = vsub.s32 0, %v180
    %v182 = vrot.slane %v177, %v181
    %184 = vmatprep.subr.mxu0 0.0
    %185 = vmatpush1.msra.mxu0 %v161
    %186 = vmatprep.subr.mxu0 0.0
    %187 = vmatpush1.msra.mxu0 %v162
    %188 = vmatprep.subr.mxu0 0.0
    %189 = vmatpush1.msra.mxu0 %v163
    %190 = vmatprep.subr.mxu0 0.0
    %191 = vmatpush1.msra.mxu0 %v164
    %192 = vmatprep.subr.mxu0 0.0
    %193 = vmatpush1.msra.mxu0 %v165
    %194 = vmatprep.subr.mxu0 0.0
    %195 = vmatpush1.msra.mxu0 %v166
    %196 = vmatprep.subr.mxu0 0.0
    %197 = vmatpush1.msra.mxu0 %v167
    %198 = vmatprep.subr.mxu0 0.0
    %199 = vmatpush1.msra.mxu0 %v168
    %200 = vmatprep.subr.mxu0 0.0
    %201 = vmatpush1.msra.mxu0 %v169
    %202 = vmatprep.subr.mxu0 0.0
    %203 = vmatpush1.msra.mxu0 %v170
    %204 = vmatprep.subr.mxu0 0.0
    %205 = vmatpush1.msra.mxu0 %v171
    %206 = vmatprep.subr.mxu0 0.0
    %207 = vmatpush1.msra.mxu0 %v172
    %208 = vmatprep.subr.mxu0 0.0
    %209 = vmatpush1.msra.mxu0 %v173
    %210 = vmatprep.subr.mxu0 0.0
    %211 = vmatpush1.msra.mxu0 %v174
    %212 = vmatprep.subr.mxu0 0.0
    %213 = vmatpush1.msra.mxu0 %v175
    %214 = vmatprep.subr.mxu0 0.0
    %215 = vmatpush1.msra.mxu0 %v176
    %216 = vmatprep.subr.mxu0 0.0
    %217 = vmatpush1.msra.mxu0 0.0
    %218 = vmatprep.subr.mxu0 0.0
    %219 = vmatpush1.msra.mxu0 0.0
    %220 = vmatprep.subr.mxu0 0.0
    %221 = vmatpush1.msra.mxu0 0.0
    %222 = vmatprep.subr.mxu0 0.0
    %223 = vmatpush1.msra.mxu0 0.0
    %224 = vmatprep.subr.mxu0 0.0
    %225 = vmatpush1.msra.mxu0 0.0
    %226 = vmatprep.subr.mxu0 0.0
    %227 = vmatpush1.msra.mxu0 0.0
    %228 = vmatprep.subr.mxu0 0.0
    %229 = vmatpush1.msra.mxu0 0.0
    %230 = vmatprep.subr.mxu0 0.0
    %231 = vmatpush1.msra.mxu0 0.0
    %232 = vmatprep.subr.mxu0 0.0
    %233 = vmatpush1.msra.mxu0 0.0
    %234 = vmatprep.subr.mxu0 0.0
    %235 = vmatpush1.msra.mxu0 0.0
    %236 = vmatprep.subr.mxu0 0.0
    %237 = vmatpush1.msra.mxu0 0.0
    %238 = vmatprep.subr.mxu0 0.0
    %239 = vmatpush1.msra.mxu0 0.0
    %240 = vmatprep.subr.mxu0 0.0
    %241 = vmatpush1.msra.mxu0 0.0
    %242 = vmatprep.subr.mxu0 0.0
    %243 = vmatpush1.msra.mxu0 0.0
    %244 = vmatprep.subr.mxu0 0.0
    %245 = vmatpush1.msra.mxu0 0.0
    %246 = vmatprep.subr.mxu0 0.0
    %247 = vmatpush1.msra.mxu0 0.0
    %248 = vmatprep.mubr.f32.mxu0 0.0
    %249 = vmatmul.mubr.f32.gmra.mrb[0].mxu0 %v160
    %v250 = vpop.f32.mrb[0].mxu0
    %v251 = vadd.f32 %v182, %v250
    %v252 = vpop.f32.mrb[0].mxu0
    %253 = vdwg.mxu0
    %254 = vst [vmem:[#allocation8] sm:$0xff] %v251
    // Predicated region
    $region34: #{tpu_custom_call.1} parent=1 // pred_check
      _
    $region35: #{tpu_custom_call.1} parent=1 // pred_check_branch
      %256 = sbr.rel (0) target = $region37
    $region36: #{tpu_custom_call.1} parent=1 // pred_region
      %s258 = ssub.s32 128, 128
      %259 = vsyncadd [#allocation4], %s258
      %s261 = sshll.u32 [#allocation8], 4
      %s262 = int_to_ptr.vmem [resolvable:$true] %s261
      %264 = dma.vmem_to_hbm [thread:$0]  %s262, 128, %s5, [#allocation4]
    $region37: #{tpu_custom_call.1} parent=1 // pred_fallthru
      _
    // Predicated region
    $region38: #{tpu_custom_call.1} parent=1 // pred_check
      _
    $region39: #{tpu_custom_call.1} parent=1 // pred_check_branch
      %266 = sbr.rel (0) target = $region41
    $region40: #{tpu_custom_call.1} parent=1 // pred_region
      %267 = dma.done [#allocation4], 128
    $region41: #{tpu_custom_call.1} parent=1 // pred_fallthru
      _
    %268 = vsyncpa [#allocation3], 1
    %269 = vsyncpa [#allocation6], 1
    %270 = vsyncpa [#allocation4], 1

</llo_original>
